<compile_context>
chip_gen: v6e
topology: v6e:2x2x1
jax: 0.10.0
libtpu: 0.0.40
codegen_flags: <defaults>
</compile_context>

<pallas_src>
import jax
import jax.numpy as jnp
from jax.experimental import pallas as pl
from jax.experimental.pallas import tpu as pltpu


def _concat_half_kernel(x_ref, y_ref, o_ref):
    # x_ref: (bt, Cx*F), y_ref: (bt, Cy*F), o_ref: (bt, (Cx+Cy)*F)
    # One [x | y] copy per grid step; the grid's r axis places it at the first
    # or second half of the output row.  All boundaries are 128-aligned, so
    # both stores are full, unmasked vst's.
    xf = x_ref.shape[1]
    o_ref[:, 0:xf] = x_ref[...]
    o_ref[:, xf:] = y_ref[...]


def _vmem_budget_and_cap():
    """Generation-aware (blocking budget, vmem_limit_bytes cap)."""
    try:
        cap_bytes = int(pltpu.get_tpu_info().vmem_capacity_bytes)
    except Exception:
        cap_bytes = 64 << 20  # conservative (v7x-sized) fallback
    if cap_bytes <= (64 << 20):        # v7x: 64 MiB physical VMEM per TC
        return 24 << 20, 56 << 20
    return 56 << 20, 112 << 20         # v5e / v6e: 128 MiB physical VMEM


def _sublane_pack(dtype):
    itemsize = jnp.dtype(dtype).itemsize
    return {4: 8, 2: 16, 1: 32}.get(itemsize, 8)


def _reference_concat(x, y):
    v0 = jnp.concatenate([x, y], axis=1)
    return jnp.concatenate([v0, v0], axis=1)


def model_forward(x, y, *, force_pallas=False):
    """x: (B, Cx, D, H, W), y: (B, Cy, D, H, W) -> cat([x, y, x, y], axis=1)."""
    assert x.shape[0] == y.shape[0] and x.shape[2:] == y.shape[2:]
    assert x.dtype == y.dtype
    B, Cx = x.shape[0], x.shape[1]
    Cy = y.shape[1]
    spatial = tuple(x.shape[2:])
    F = 1
    for d in spatial:
        F *= d
    Co = 2 * (Cx + Cy)
    S = (Cx + Cy) * F                      # one [x | y] copy per batch row
    itemsize = jnp.dtype(x.dtype).itemsize

    # Every segment boundary (x end, copy end) must be 128-lane aligned so all
    # stores are unmasked vst's.  Otherwise XLA's concat is already at roofline.
    lane_aligned = (S % 128 == 0) and ((Cx * F) % 128 == 0)

    # Tiny copies: custom-call launch + per-step overhead dominates; bypass.
    total_out_bytes = B * 2 * S * itemsize
    if not lane_aligned or (not force_pallas and total_out_bytes < (4 << 20)):
        return _reference_concat(x, y)

    # Lane-dense rows: batch on sublanes, flattened channels*spatial on lanes.
    x2 = x.reshape(B, Cx * F)
    y2 = y.reshape(B, Cy * F)

    # ---- batch tile size (bt) against a generation-aware VMEM budget --------
    pack = _sublane_pack(x.dtype)
    budget, limit_cap = _vmem_budget_and_cap()
    # Double-buffered footprint per batch row: 2 * (x_blk + y_blk + out_blk).
    per_row = 4 * S * itemsize
    max_bt = max(1, budget // per_row)
    if B <= max_bt:
        bt = B
    else:
        bt = min(max(pack, (max_bt // pack) * pack), B)
    # Cap bt so the batch axis has >= 2 tiles when B permits, letting megacore
    # shard b (each core reads its inputs once) rather than the duplicate axis r.
    if B > pack:
        half_b = -(-(-(-B // 2)) // pack) * pack   # round_up(cdiv(B, 2), pack)
        bt = min(bt, half_b)
    nb = pl.cdiv(B, bt)

    needed_vmem = bt * per_row + (2 << 20)
    vmem_limit = int(min(max(needed_vmem, 32 << 20), limit_cap))

    out2 = pl.pallas_call(
        _concat_half_kernel,
        out_shape=jax.ShapeDtypeStruct((B, 2 * S), x.dtype),
        grid_spec=pltpu.PrefetchScalarGridSpec(
            num_scalar_prefetch=0,
            # r innermost: input block indices are constant across consecutive
            # steps, so Pallas skips the input re-DMA for the duplicate copy.
            grid=(nb, 2),
            in_specs=[
                pl.BlockSpec((bt, Cx * F), lambda b, r: (b, 0)),
                pl.BlockSpec((bt, Cy * F), lambda b, r: (b, 0)),
            ],
            out_specs=pl.BlockSpec((bt, S), lambda b, r: (b, r)),
        ),
        compiler_params=pltpu.CompilerParams(
            dimension_semantics=("parallel", "arbitrary"),
            vmem_limit_bytes=vmem_limit),
    )(x2, y2)

    return out2.reshape((B, Co) + spatial)


if __name__ == "__main__":
    key = jax.random.PRNGKey(0)

    # Test 1: small shapes consistent with the module (all boundaries
    # 128-aligned: Cx*F = 3072, S = 5376).  Force the Pallas path so the
    # kernel is actually exercised despite the small-size bypass.
    kx, ky = jax.random.split(key)
    B, Cx, Cy, D, Hs, Ws = 2, 4, 3, 3, 16, 16
    x = jax.random.normal(kx, (B, Cx, D, Hs, Ws), dtype=jnp.float32)
    y = jax.random.normal(ky, (B, Cy, D, Hs, Ws), dtype=jnp.float32)

    out = model_forward(x, y, force_pallas=True)
    out = jax.block_until_ready(out)
    ref = _reference_concat(x, y)
    assert out.shape == (B, 2 * (Cx + Cy), D, Hs, Ws), out.shape
    assert jnp.array_equal(out, ref), "mismatch vs reference (test 1)"

    # Test 2: batch not divisible by the tile size (B=10 -> bt=8, nb=2 with a
    # partial edge block), exercising megacore batch-sharding + edge masking.
    kx2, ky2 = jax.random.split(jax.random.PRNGKey(1))
    B2 = 10
    x2 = jax.random.normal(kx2, (B2, Cx, D, Hs, Ws), dtype=jnp.float32)
    y2 = jax.random.normal(ky2, (B2, Cy, D, Hs, Ws), dtype=jnp.float32)
    out2 = jax.block_until_ready(model_forward(x2, y2, force_pallas=True))
    ref2 = _reference_concat(x2, y2)
    assert out2.shape == (B2, 2 * (Cx + Cy), D, Hs, Ws), out2.shape
    assert jnp.array_equal(out2, ref2), "mismatch vs reference (test 2)"

    print("KERNEL_OK")
</pallas_src>

<mosaic_0001>
module attributes {stable_mosaic.version = 11 : i64} {
  func.func @_concat_half_kernel(%arg0: i32, %arg1: i32, %arg2: memref<2x3072xf32, #tpu.memory_space<vmem>>, %arg3: memref<2x2304xf32, #tpu.memory_space<vmem>>, %arg4: memref<2x5376xf32, #tpu.memory_space<vmem>>) attributes {dimension_semantics = [#tpu.dimension_semantics<parallel>, #tpu.dimension_semantics<arbitrary>], iteration_bounds = array<i64: 1, 2>, scalar_prefetch = 0 : i64, scratch_operands = 0 : i64, tpu.core_type = #tpu.core_type<tc>, window_params = [{transform_indices = @transform_0, window_bounds = array<i64: 2, 3072>}, {transform_indices = @transform_1, window_bounds = array<i64: 2, 2304>}, {transform_indices = @transform_2, window_bounds = array<i64: 2, 5376>}]} {
    %c0 = arith.constant 0 : index
    %c0_0 = arith.constant 0 : index
    %0 = vector.load %arg2[%c0, %c0_0] : memref<2x3072xf32, #tpu.memory_space<vmem>>, vector<2x3072xf32>
    %c0_1 = arith.constant 0 : index
    %c0_2 = arith.constant 0 : index
    %1 = vector.load %arg4[%c0_1, %c0_2] : memref<2x5376xf32, #tpu.memory_space<vmem>>, vector<2x3072xf32>
    tpu.vector_store %arg4[%c0_1, %c0_2], %0 {strides = array<i32>} : memref<2x5376xf32, #tpu.memory_space<vmem>>, vector<2x3072xf32>,
    %c0_3 = arith.constant 0 : index
    %c0_4 = arith.constant 0 : index
    %2 = vector.load %arg3[%c0_3, %c0_4] : memref<2x2304xf32, #tpu.memory_space<vmem>>, vector<2x2304xf32>
    %c0_5 = arith.constant 0 : index
    %c3072 = arith.constant 3072 : index
    %3 = vector.load %arg4[%c0_5, %c3072] : memref<2x5376xf32, #tpu.memory_space<vmem>>, vector<2x2304xf32>
    tpu.vector_store %arg4[%c0_5, %c3072], %2 {strides = array<i32>} : memref<2x5376xf32, #tpu.memory_space<vmem>>, vector<2x2304xf32>,
    return
  }
  func.func @transform_0(%arg0: i32, %arg1: i32) -> (i32, i32) {
    %c0_i32 = arith.constant 0 : i32
    %c0_i32_0 = arith.constant 0 : i32
    return %arg0, %c0_i32 : i32, i32
  }
  func.func @transform_1(%arg0: i32, %arg1: i32) -> (i32, i32) {
    %c0_i32 = arith.constant 0 : i32
    %c0_i32_0 = arith.constant 0 : i32
    return %arg0, %c0_i32 : i32, i32
  }
  func.func @transform_2(%arg0: i32, %arg1: i32) -> (i32, i32) {
    %c0_i32 = arith.constant 0 : i32
    return %arg0, %arg1 : i32, i32
  }
}

</mosaic_0001>

<llo_original>
// kernel: tpu_custom_call.1
$region0: #{tpu_custom_call.1}
  #allocation0 [shape = 'u32[]', space=smem, size = 0x4, offset = 0x4, fixed_abs, tag = 'smem constant byte address 0x4 - core index']
  #allocation1 [shape = 'u32[144,128]{1,0:T(1,128)}', space=vmem, size = 0x12000, scoped, tag = 'internal scratch']
  %s0 = inlined_call_operand.hbm [shape: f32[2,3072], index: 0, kind: input, shape index: {}]
  %s1 = inlined_call_operand.hbm [shape: f32[2,2304], index: 1, kind: input, shape index: {}]
  %s2 = inlined_call_operand.hbm [shape: f32[2,10752], index: 2, kind: output, shape index: {}]
  %s3 = sld [smem:[#allocation0]]
  $region49: #{tpu_custom_call.1} parent=0
    _
  %s5 = ssub.s32 1, %s3
  %s6 = scalar_select 0, %s5, %s3
  $region1: #{tpu_custom_call.1} parent=0
    #allocation2 [shape = 'u8[24576]{0}', space=vmem, size = 0x6000, scoped, tag = 'input window, operand 0, single buffered']
    #allocation3 [shape = 's32[2]{0}', space=sflag, size = 0x8, scoped, tag = 'scoped memory for tpu_custom_call.1']
    #allocation4 [shape = 's32[2]{0}', space=sflag, size = 0x8, scoped, tag = 'scoped memory for tpu_custom_call.1']
    #allocation5 [shape = 'u8[18432]{0}', space=vmem, size = 0x4800, scoped, tag = 'input window, operand 1, single buffered']
    #allocation6 [shape = 's32[1]{0}', space=sflag, size = 0x4, scoped, tag = 'scoped memory for tpu_custom_call.1']
    #allocation7 [shape = 'u8[86016]{0}', space=vmem, size = 0x15000, scoped, tag = 'output window, operand 0']
    %7 = vsyncpa [#allocation3], 0
    %8 = vsyncpa [#allocation6], 0
    %9 = vsyncpa [#allocation4], 0
    %s10 = scalar_lea.sflag [#allocation4], 1
    %11 = vsyncpa %s10, 0
    loop: start=0, step=1, limit=4
    $region2: #{tpu_custom_call.1} parent=1 // loop_pre_header
      _
    $region3: #{tpu_custom_call.1} parent=1 // loop_header
      %s13 = sphi 0, %s17
      %p14 = scmp.ge.s32.totalorder %s13, 4
      %s20 = sphi 0, %s32
      %s21 = sphi 0, %s28
      %s22 = sphi 0, %s20
      %s23 = sphi 0, %s21
      %s24 = sphi 0, %s22
      %s25 = sphi 0, %s23
      %s35 = sphi 0, %s37
      %s38 = sphi 0, %s35
      %s39 = sphi 0, %s38
      %s55 = sphi 0, %s39
      %s61 = sphi 0, %s63
      %s64 = sphi 0, %s61
      %s65 = sphi 0, %s64
      %s81 = sphi 0, %s65
      %s89 = sphi 0, %s91
      %s92 = sphi 0, %s89
      %s93 = sphi 0, %s92
      %s109 = sphi 0, %s93
    $region4: #{tpu_custom_call.1} parent=1 // loop_header_branch
      %16 = sbr.rel (%p14) target = $region8
    $region5: #{tpu_custom_call.1} parent=1 // loop_body
      %s18 = ssub.s32 %s13, 1
      %s19 = ssub.s32 %s13, 2
      %s26 = sadd.s32 1, %s21
      %p27 = scmp.ge.s32.totalorder %s26, 2
      %s28 = scalar_select %p27, 0, %s26
      %s29 = sadd.s32 1, %s20
      %s30 = scalar_select %p27, %s29, %s20
      %p31 = scmp.ge.s32.totalorder %s30, 1
      %s32 = scalar_select %p31, 0, %s30
      %s33 = ssub.s32 %s20, %s32
      %p34 = scmp.eq.s32.totalorder %s33, 0
      %s36 = sadd.s32 %s35, 1
      %s37 = scalar_select %p34, %s35, %s36
      %p40 = pneg %p34
      %p41 = scmp.eq.s32.totalorder %s13, 1
      %p42 = por %p40, %p41
      %p43 = scmp.ne.s32.totalorder %s35, %s38
      %p44 = scmp.eq.s32.totalorder %s13, 0
      %p45 = por %p43, %p44
      %p46 = scmp.ne.s32.totalorder %s35, %s38
      %p47 = scmp.eq.s32.totalorder %s18, 1
      %p48 = por %p46, %p47
      %p49 = scmp.ne.s32.totalorder %s38, %s39
      %p50 = scmp.eq.s32.totalorder %s18, 0
      %p51 = por %p49, %p50
      %p52 = scmp.ne.s32.totalorder %s38, %s39
      %p53 = scmp.eq.s32.totalorder %s19, 1
      %p54 = por %p52, %p53
      %p56 = scmp.ne.s32.totalorder %s39, %s55
      %p57 = scmp.eq.s32.totalorder %s19, 0
      %p58 = por %p56, %p57
      %s59 = ssub.s32 %s20, %s32
      %p60 = scmp.eq.s32.totalorder %s59, 0
      %s62 = sadd.s32 %s61, 1
      %s63 = scalar_select %p60, %s61, %s62
      %p66 = pneg %p60
      %p67 = scmp.eq.s32.totalorder %s13, 1
      %p68 = por %p66, %p67
      %p69 = scmp.ne.s32.totalorder %s61, %s64
      %p70 = scmp.eq.s32.totalorder %s13, 0
      %p71 = por %p69, %p70
      %p72 = scmp.ne.s32.totalorder %s61, %s64
      %p73 = scmp.eq.s32.totalorder %s18, 1
      %p74 = por %p72, %p73
      %p75 = scmp.ne.s32.totalorder %s64, %s65
      %p76 = scmp.eq.s32.totalorder %s18, 0
      %p77 = por %p75, %p76
      %p78 = scmp.ne.s32.totalorder %s64, %s65
      %p79 = scmp.eq.s32.totalorder %s19, 1
      %p80 = por %p78, %p79
      %p82 = scmp.ne.s32.totalorder %s65, %s81
      %p83 = scmp.eq.s32.totalorder %s19, 0
      %p84 = por %p82, %p83
      %s85 = ssub.s32 %s20, %s32
      %s86 = ssub.s32 %s21, %s28
      %s87 = sor.u32 %s85, %s86
      %p88 = scmp.eq.s32.totalorder %s87, 0
      %s90 = sadd.s32 %s89, 1
      %s91 = scalar_select %p88, %s89, %s90
      %p94 = pneg %p88
      %p95 = scmp.eq.s32.totalorder %s13, 1
      %p96 = por %p94, %p95
      %p97 = scmp.ne.s32.totalorder %s89, %s92
      %p98 = scmp.eq.s32.totalorder %s13, 0
      %p99 = por %p97, %p98
      %p100 = scmp.ne.s32.totalorder %s89, %s92
      %p101 = scmp.eq.s32.totalorder %s18, 1
      %p102 = por %p100, %p101
      %p103 = scmp.ne.s32.totalorder %s92, %s93
      %p104 = scmp.eq.s32.totalorder %s18, 0
      %p105 = por %p103, %p104
      %p106 = scmp.ne.s32.totalorder %s92, %s93
      %p107 = scmp.eq.s32.totalorder %s19, 1
      %p108 = por %p106, %p107
      %p110 = scmp.ne.s32.totalorder %s93, %s109
      %p111 = scmp.eq.s32.totalorder %s19, 0
      %p112 = por %p110, %p111
      %p113 = scmp.le.s32.totalorder 1, %s13
      %p114 = scmp.lt.s32.totalorder %s13, 3
      %p115 = pnand %p113, %p114
      %p116 = pneg %p115
      // Predicated region
      $region9: #{tpu_custom_call.1} parent=5 // pred_check
        _
      $region10: #{tpu_custom_call.1} parent=5 // pred_check_branch
        %118 = sbr.rel (%p115) target = $region12
      $region11: #{tpu_custom_call.1} parent=5 // pred_region
        %s119 = ssub.s32 %s13, 1
        // Predicated region
        $region13: #{tpu_custom_call.1} parent=11 // pred_check
          %p120 = pneg %p51
        $region14: #{tpu_custom_call.1} parent=11 // pred_check_branch
          %122 = sbr.rel (%p120) target = $region16
        $region15: #{tpu_custom_call.1} parent=11 // pred_region
          %s124 = ssub.s32 768, 768
          %125 = vsyncadd [#allocation3], %s124
          %s126 = smul.addr %s22, 24
          %s127 = smul.addr %s126, 32
          %s128 = scalar_lea.hbm %s0, %s127
          %s130 = sshll.u32 [#allocation2], 4
          %s131 = int_to_ptr.vmem [resolvable:$true] %s130
          %133 = dma.hbm_to_vmem [thread:$0]  %s128, 768, %s131, [#allocation3]
        $region16: #{tpu_custom_call.1} parent=11 // pred_fallthru
          _
        // Predicated region
        $region17: #{tpu_custom_call.1} parent=11 // pred_check
          %p134 = pneg %p77
        $region18: #{tpu_custom_call.1} parent=11 // pred_check_branch
          %136 = sbr.rel (%p134) target = $region20
        $region19: #{tpu_custom_call.1} parent=11 // pred_region
          %s138 = ssub.s32 576, 576
          %139 = vsyncadd [#allocation6], %s138
          %s140 = smul.addr %s22, 18
          %s141 = smul.addr %s140, 32
          %s142 = scalar_lea.hbm %s1, %s141
          %s144 = sshll.u32 [#allocation5], 4
          %s145 = int_to_ptr.vmem [resolvable:$true] %s144
          %147 = dma.hbm_to_vmem [thread:$0]  %s142, 576, %s145, [#allocation6]
        $region20: #{tpu_custom_call.1} parent=11 // pred_fallthru
          _
      $region12: #{tpu_custom_call.1} parent=5 // pred_fallthru
        _
      %p148 = scmp.lt.s32.totalorder %s13, 2
      // Predicated region
      $region21: #{tpu_custom_call.1} parent=5 // pred_check
        %p149 = pneg %p148
      $region22: #{tpu_custom_call.1} parent=5 // pred_check_branch
        %151 = sbr.rel (%p149) target = $region24
      $region23: #{tpu_custom_call.1} parent=5 // pred_region
        _
      $region24: #{tpu_custom_call.1} parent=5 // pred_fallthru
        _
      %p152 = scmp.le.s32.totalorder 1, %s13
      %p153 = scmp.lt.s32.totalorder %s13, 3
      %p154 = pnand %p152, %p153
      %p155 = pneg %p154
      // Predicated region
      $region25: #{tpu_custom_call.1} parent=5 // pred_check
        _
      $region26: #{tpu_custom_call.1} parent=5 // pred_check_branch
        %157 = sbr.rel (%p154) target = $region28
      $region27: #{tpu_custom_call.1} parent=5 // pred_region
        %s158 = ssub.s32 %s13, 1
        // Predicated region
        $region29: #{tpu_custom_call.1} parent=27 // pred_check
          %p159 = pneg %p51
        $region30: #{tpu_custom_call.1} parent=27 // pred_check_branch
          %161 = sbr.rel (%p159) target = $region32
        $region31: #{tpu_custom_call.1} parent=27 // pred_region
          %162 = dma.done [#allocation3], 768
        $region32: #{tpu_custom_call.1} parent=27 // pred_fallthru
          _
        // Predicated region
        $region33: #{tpu_custom_call.1} parent=27 // pred_check
          %p163 = pneg %p77
        $region34: #{tpu_custom_call.1} parent=27 // pred_check_branch
          %165 = sbr.rel (%p163) target = $region36
        $region35: #{tpu_custom_call.1} parent=27 // pred_region
          %166 = dma.done [#allocation6], 576
        $region36: #{tpu_custom_call.1} parent=27 // pred_fallthru
          _
        %p167 = pneg %p51
        %p168 = pneg %p48
        %p169 = pneg %p77
        %p170 = pneg %p74
        %p171 = pneg %p105
        %p172 = pneg %p102
        %s173 = sand.u32 %s92, 1
        %s174 = scalar_lea.sflag [#allocation4], %s173
        %s175 = sand.u32 %s92, 1
        %s176 = smul.addr %s175, 84
        %s177 = scalar_lea.vmem [#allocation7], %s176
        %s178 = smul.u32 42, %s23
        %v179 = vld [vmem:[#allocation2] sm:$0xff]
        %v180 = vld [vmem:[#allocation2 + $0x8] sm:$0xff]
        %v181 = vld [vmem:[#allocation2 + $0x10] sm:$0xff]
        %v182 = vld [vmem:[#allocation2 + $0x18] sm:$0xff]
        %v183 = vld [vmem:[#allocation2 + $0x20] sm:$0xff]
        %v184 = vld [vmem:[#allocation2 + $0x28] sm:$0xff]
        %185 = vst [vmem:[%s177] sm:$0xff] %v179
        %186 = vst [vmem:[%s177 + $0x8] sm:$0xff] %v180
        %187 = vst [vmem:[%s177 + $0x10] sm:$0xff] %v181
        %188 = vst [vmem:[%s177 + $0x18] sm:$0xff] %v182
        %189 = vst [vmem:[%s177 + $0x20] sm:$0xff] %v183
        %190 = vst [vmem:[%s177 + $0x28] sm:$0xff] %v184
        %v191 = vld [vmem:[#allocation5] sm:$0xff]
        %v192 = vld [vmem:[#allocation5 + $0x8] sm:$0xff]
        %v193 = vld [vmem:[#allocation5 + $0x10] sm:$0xff]
        %v194 = vld [vmem:[#allocation5 + $0x18] sm:$0xff]
        %v195 = vld [vmem:[#allocation5 + $0x20] sm:$0xf]
        %196 = vst [vmem:[%s177 + $0x30] sm:$0xff] %v191
        %197 = vst [vmem:[%s177 + $0x38] sm:$0xff] %v192
        %198 = vst [vmem:[%s177 + $0x40] sm:$0xff] %v193
        %199 = vst [vmem:[%s177 + $0x48] sm:$0xff] %v194
        %200 = vst [vmem:[%s177 + $0x50] sm:$0xf] %v195
        %s201 = sand.u32 %s92, 1
        %s202 = scalar_lea.sflag [#allocation4], %s201
        %s203 = sand.u32 %s92, 1
        %s204 = smul.addr %s203, 84
        %s205 = scalar_lea.vmem [#allocation7], %s204
        // Predicated region
        $region37: #{tpu_custom_call.1} parent=27 // pred_check
          %p206 = pneg %p102
        $region38: #{tpu_custom_call.1} parent=27 // pred_check_branch
          %208 = sbr.rel (%p206) target = $region40
        $region39: #{tpu_custom_call.1} parent=27 // pred_region
          %s209 = smul.u32 42, %s23
          %s211 = ssub.s32 1344, 1344
          %212 = vsyncadd %s202, %s211
          %s213 = smul.addr %s22, 84
          %s214 = sadd.s32 %s209, %s213
          %s215 = smul.addr %s214, 32
          %s216 = scalar_lea.hbm %s2, %s215
          %s218 = sshll.u32 %s205, 4
          %s219 = int_to_ptr.vmem [resolvable:$true] %s218
          %221 = dma.vmem_to_hbm [thread:$0]  %s219, 1344, %s216, %s202
        $region40: #{tpu_custom_call.1} parent=27 // pred_fallthru
          _
      $region28: #{tpu_custom_call.1} parent=5 // pred_fallthru
        _
      %p222 = scmp.le.s32.totalorder 2, %s13
      // Predicated region
      $region41: #{tpu_custom_call.1} parent=5 // pred_check
        %p223 = pneg %p222
      $region42: #{tpu_custom_call.1} parent=5 // pred_check_branch
        %225 = sbr.rel (%p223) target = $region44
      $region43: #{tpu_custom_call.1} parent=5 // pred_region
        %s226 = ssub.s32 %s13, 2
        // Predicated region
        $region45: #{tpu_custom_call.1} parent=43 // pred_check
          %p227 = pneg %p108
        $region46: #{tpu_custom_call.1} parent=43 // pred_check_branch
          %229 = sbr.rel (%p227) target = $region48
        $region47: #{tpu_custom_call.1} parent=43 // pred_region
          %s230 = sand.u32 %s93, 1
          %s231 = scalar_lea.sflag [#allocation4], %s230
          %s232 = sand.u32 %s93, 1
          %s233 = smul.addr %s232, 84
          %s234 = scalar_lea.vmem [#allocation7], %s233
          %235 = dma.done %s231, 1344
        $region48: #{tpu_custom_call.1} parent=43 // pred_fallthru
          _
      $region44: #{tpu_custom_call.1} parent=5 // pred_fallthru
        _
    $region6: #{tpu_custom_call.1} parent=1 // loop_footer
      %s17 = sadd.s32 1, %s13
    $region7: #{tpu_custom_call.1} parent=1 // loop_footer_branch
      %12 = sbr.rel target = $region3
    $region8: #{tpu_custom_call.1} parent=1 // loop_exit
      _
    %236 = vsyncpa [#allocation3], 1
    %s237 = scalar_lea.sflag [#allocation3], 1
    %238 = vsyncpa %s237, 1
    %239 = vsyncpa [#allocation6], 1
    %240 = vsyncpa [#allocation4], 1
    %s241 = scalar_lea.sflag [#allocation4], 1
    %242 = vsyncpa %s241, 1

</llo_original>
